<compile_context>
chip_gen: v5e
topology: v5e:2x2
jax: 0.10.0
libtpu: 0.0.40
codegen_flags: <defaults>
</compile_context>

<pallas_src>
import jax
import jax.numpy as jnp
from jax.experimental import pallas as pl
from jax.experimental.pallas import tpu as pltpu

# ---------------------------------------------------------------------------
# Model constants (implied by the 16*5*5 flatten: 3-channel 32x32 input)
# ---------------------------------------------------------------------------
_H = 32                    # input spatial size
_HW = _H * _H              # 1024 flattened spatial positions (lane axis)
_C1, _C2 = 6, 16           # conv output channels
_FC1, _FC2, _FC3 = 120, 84, 1
_PAD = 128                 # lane padding for the FC stack


# ---------------------------------------------------------------------------
# pltpu.roll direction self-check (one tiny probe kernel, run once outside jit)
# ---------------------------------------------------------------------------
_ROLL_MATCHES_NUMPY = None


def _roll_probe_kernel(x_ref, o_ref):
    o_ref[...] = pltpu.roll(x_ref[...], 1, 1)


def _ensure_roll_convention():
    """Every conv tap / pool window below is a lane rotation; a flipped rotate
    direction would be silently wrong, so probe the hardware op once."""
    global _ROLL_MATCHES_NUMPY
    if _ROLL_MATCHES_NUMPY is None:
        x = jax.lax.broadcasted_iota(jnp.float32, (8, 128), 1)
        y = pl.pallas_call(
            _roll_probe_kernel,
            out_shape=jax.ShapeDtypeStruct((8, 128), jnp.float32),
        )(x)
        _ROLL_MATCHES_NUMPY = bool(y[0, 0] == 127.0)   # np.roll convention


def _shift_left(v, off):
    """Return w with w[..., L] == v[..., (L + off) % n]; wrapped lanes are
    never read by any valid output position (checked analytically)."""
    if off == 0:
        return v
    assert _ROLL_MATCHES_NUMPY is not None, "run _ensure_roll_convention() first"
    n = v.shape[-1]
    shift = (n - off) if _ROLL_MATCHES_NUMPY else off
    return pltpu.roll(v, shift, v.ndim - 1)


# ---------------------------------------------------------------------------
# The fused forward kernel (one image per grid step)
# ---------------------------------------------------------------------------
def _lenet_kernel(x_ref, w1_ref, b1_ref, w2_ref, b2_ref, sel_ref,
                  wf1_ref, bf1_ref, wf2_ref, bf2_ref, wf3_ref, bf3_ref, o_ref):
    f32, bf16 = jnp.float32, jnp.bfloat16

    # ---- conv1: 5x5, 3 -> 6.  Activation layout: lane = r*32 + c ---------
    x = x_ref[0]                                          # (3, 1024) bf16
    acc = jnp.zeros((_C1, _HW), f32)
    for i in range(5):
        for j in range(5):
            xs = _shift_left(x, i * _H + j)               # tap (i, j)
            acc = acc + jnp.dot(w1_ref[i * 5 + j], xs,
                                preferred_element_type=f32)
    act1 = jnp.maximum(acc + b1_ref[...], 0.0)            # valid at r, c < 28

    # ---- pool1 (2x2/2): pooled (R, C) lives at lane 64R + 2C --------------
    p1 = act1
    for off in (1, _H, _H + 1):
        p1 = jnp.maximum(p1, _shift_left(act1, off))
    p1 = p1.astype(bf16)                                  # valid at R, C < 14

    # ---- conv2: 5x5, 6 -> 16.  Tap (i, j) is a rotation by 64i + 2j -------
    acc = jnp.zeros((_C2, _HW), f32)
    for i in range(5):
        for j in range(5):
            xs = _shift_left(p1, 64 * i + 2 * j)
            acc = acc + jnp.dot(w2_ref[i * 5 + j], xs,
                                preferred_element_type=f32)
    act2 = jnp.maximum(acc + b2_ref[...], 0.0)            # valid at R, C < 10

    # ---- pool2: pooled (R', C') lives at lane 128R' + 4C' -----------------
    p2 = act2
    for off in (2, 64, 66):
        p2 = jnp.maximum(p2, _shift_left(act2, off))
    p2 = p2.astype(bf16)                                  # valid at R', C' < 5

    # ---- gather the 25 valid lanes per channel into a dense (16, 32) ------
    # feats[c, p] == torch's flattened feature [c*25 + p]  (NCHW .view order)
    feats = jnp.dot(p2, sel_ref[...], preferred_element_type=f32)
    feats = feats.astype(bf16)

    # ---- fc1 (400 -> 120, lane-padded to 128): 16 per-channel matmuls -----
    h = jnp.zeros((1, _PAD), f32)
    for c in range(_C2):
        h = h + jnp.dot(feats[c:c + 1, :], wf1_ref[c],
                        preferred_element_type=f32)
    h = jnp.maximum(h + bf1_ref[...], 0.0).astype(bf16)   # padded lanes stay 0

    # ---- fc2, fc3 (128-lane zero-padded weights; padded lanes stay 0) -----
    h = jnp.maximum(jnp.dot(h, wf2_ref[...], preferred_element_type=f32)
                    + bf2_ref[...], 0.0).astype(bf16)
    h = jnp.maximum(jnp.dot(h, wf3_ref[...], preferred_element_type=f32)
                    + bf3_ref[...], 0.0)
    # NOTE: the reference module really does apply ReLU after fc3.
    o_ref[0] = h.astype(o_ref.dtype)                      # lane 0 is the output


# ---------------------------------------------------------------------------
# One-time parameter preparation (PyTorch layouts -> kernel layouts)
# ---------------------------------------------------------------------------
def prepare_params(params):
    f32, bf16 = jnp.float32, jnp.bfloat16
    # conv taps: (kh*kw, Cout, Cin)
    w1 = jnp.transpose(params["conv1_w"], (2, 3, 0, 1)).reshape(25, _C1, 3)
    w2 = jnp.transpose(params["conv2_w"], (2, 3, 0, 1)).reshape(25, _C2, _C1)
    # selection matrix: lane 128*R + 4*C  ->  spatial feature index p = R*5 + C
    p = jnp.arange(25)
    lanes = 128 * (p // 5) + 4 * (p % 5)
    sel = jnp.zeros((_HW, 32), f32).at[lanes, p].set(1.0)
    # fc1 rows regrouped per conv2 channel (matches torch's NCHW flatten);
    # pad taps 25 -> 32 and outputs 120 -> 128 with zeros.
    wf1 = jnp.pad(params["fc1_w"].T.reshape(_C2, 25, _FC1),
                  ((0, 0), (0, 32 - 25), (0, _PAD - _FC1)))
    wf2 = jnp.pad(params["fc2_w"].T, ((0, _PAD - _FC1), (0, _PAD - _FC2)))
    wf3 = jnp.pad(params["fc3_w"].T, ((0, _PAD - _FC2), (0, _PAD - _FC3)))
    return {
        "w1": w1.astype(bf16),
        "b1": params["conv1_b"].reshape(_C1, 1).astype(f32),
        "w2": w2.astype(bf16),
        "b2": params["conv2_b"].reshape(_C2, 1).astype(f32),
        "sel": sel.astype(bf16),
        "wf1": wf1.astype(bf16),
        "bf1": jnp.pad(params["fc1_b"], (0, _PAD - _FC1)).reshape(1, _PAD).astype(f32),
        "wf2": wf2.astype(bf16),
        "bf2": jnp.pad(params["fc2_b"], (0, _PAD - _FC2)).reshape(1, _PAD).astype(f32),
        "wf3": wf3.astype(bf16),
        "bf3": jnp.pad(params["fc3_b"], (0, _PAD - _FC3)).reshape(1, _PAD).astype(f32),
    }


# ---------------------------------------------------------------------------
# Forward pass
# ---------------------------------------------------------------------------
@jax.jit
def _forward_jit(kp, x_nchw):
    N = x_nchw.shape[0]
    # NCHW flatten is exactly the (C, r*32 + c) layout the kernel wants.
    x3 = x_nchw.reshape(N, 3, _HW).astype(jnp.bfloat16)

    const2 = lambda n: (0, 0)
    const3 = lambda n: (0, 0, 0)
    in_specs = [
        pl.BlockSpec((1, 3, _HW), lambda n: (n, 0, 0)),   # one image per step
        pl.BlockSpec((25, _C1, 3), const3),               # conv1 taps (resident)
        pl.BlockSpec((_C1, 1), const2),
        pl.BlockSpec((25, _C2, _C1), const3),             # conv2 taps
        pl.BlockSpec((_C2, 1), const2),
        pl.BlockSpec((_HW, 32), const2),                  # lane-selection matrix
        pl.BlockSpec((_C2, 32, _PAD), const3),            # fc1 (per-channel)
        pl.BlockSpec((1, _PAD), const2),
        pl.BlockSpec((_PAD, _PAD), const2),               # fc2
        pl.BlockSpec((1, _PAD), const2),
        pl.BlockSpec((_PAD, _PAD), const2),               # fc3
        pl.BlockSpec((1, _PAD), const2),
    ]
    out = pl.pallas_call(
        _lenet_kernel,
        grid=(N,),
        in_specs=in_specs,
        out_specs=pl.BlockSpec((1, 1, _PAD), lambda n: (n, 0, 0)),
        out_shape=jax.ShapeDtypeStruct((N, 1, _PAD), jnp.float32),
        compiler_params=pltpu.CompilerParams(
            dimension_semantics=("parallel",)),           # v7x 2-TC sharding
    )(x3, kp["w1"], kp["b1"], kp["w2"], kp["b2"], kp["sel"],
      kp["wf1"], kp["bf1"], kp["wf2"], kp["bf2"], kp["wf3"], kp["bf3"])
    return out[:, 0, :_FC3]                               # (N, 1)


def net_forward(kernel_params, x_nchw):
    _ensure_roll_convention()     # must run eagerly before the first trace
    return _forward_jit(kernel_params, x_nchw)


# ---------------------------------------------------------------------------
# Pure-JAX reference (numerical cross-check only; same bf16 rounding policy)
# ---------------------------------------------------------------------------
@jax.jit
def net_forward_reference(params, x_nchw):
    f32, bf16 = jnp.float32, jnp.bfloat16

    def conv_relu(x, w, b):
        y = jax.lax.conv_general_dilated(
            x.astype(bf16), w.astype(bf16), (1, 1), "VALID",
            dimension_numbers=("NCHW", "OIHW", "NCHW"),
            preferred_element_type=f32)
        return jnp.maximum(y + b.reshape(1, -1, 1, 1), 0.0)

    def pool(x):
        n, c, h, w = x.shape
        return x.reshape(n, c, h // 2, 2, w // 2, 2).max(axis=(3, 5))

    def dense_relu(x, w, b):
        y = jnp.dot(x.astype(bf16), w.T.astype(bf16), preferred_element_type=f32)
        return jnp.maximum(y + b, 0.0)

    x = pool(conv_relu(x_nchw, params["conv1_w"], params["conv1_b"]))
    x = pool(conv_relu(x, params["conv2_w"], params["conv2_b"]))
    x = x.reshape(x.shape[0], 16 * 5 * 5)                 # torch .view(-1, 400)
    x = dense_relu(x, params["fc1_w"], params["fc1_b"])
    x = dense_relu(x, params["fc2_w"], params["fc2_b"])
    x = dense_relu(x, params["fc3_w"], params["fc3_b"])
    return x


# ---------------------------------------------------------------------------
# Parameters (deterministic, PyTorch default-init style bounds)
# ---------------------------------------------------------------------------
def init_params(key):
    def u(k, shape, fan_in):
        bound = 1.0 / float(fan_in) ** 0.5
        return jax.random.uniform(k, shape, jnp.float32, -bound, bound)

    ks = jax.random.split(key, 10)
    return {
        "conv1_w": u(ks[0], (6, 3, 5, 5), 3 * 5 * 5),
        "conv1_b": u(ks[1], (6,), 3 * 5 * 5),
        "conv2_w": u(ks[2], (16, 6, 5, 5), 6 * 5 * 5),
        "conv2_b": u(ks[3], (16,), 6 * 5 * 5),
        "fc1_w": u(ks[4], (120, 16 * 5 * 5), 16 * 5 * 5),
        "fc1_b": u(ks[5], (120,), 16 * 5 * 5),
        "fc2_w": u(ks[6], (84, 120), 120),
        "fc2_b": u(ks[7], (84,), 120),
        "fc3_w": u(ks[8], (1, 84), 84),
        "fc3_b": u(ks[9], (1,), 84),
    }


if __name__ == "__main__":
    key = jax.random.PRNGKey(0)
    k_param, k_x = jax.random.split(key)
    params = init_params(k_param)
    # Input implied by the 16*5*5 flatten: 3-channel 32x32 images; small batch.
    x = jax.random.normal(k_x, (2, 3, 32, 32), dtype=jnp.float32)

    kernel_params = prepare_params(params)                # one-time weight prep
    out = jax.block_until_ready(net_forward(kernel_params, x))

    assert out.shape == (2, 1), out.shape
    assert out.dtype == jnp.float32
    assert bool(jnp.all(out >= 0.0))                      # final ReLU (per module)

    ref = jax.block_until_ready(net_forward_reference(params, x))
    assert bool(jnp.allclose(out, ref, rtol=2e-2, atol=2e-2)), (out, ref)

    print("KERNEL_OK")
</pallas_src>

<mosaic_0001>
module attributes {stable_mosaic.version = 11 : i64} {
  func.func @_roll_probe_kernel(%arg0: memref<8x128xf32, #tpu.memory_space<vmem>>, %arg1: memref<8x128xf32, #tpu.memory_space<vmem>>) attributes {dimension_semantics = [], scalar_prefetch = 0 : i64, scratch_operands = 0 : i64, tpu.core_type = #tpu.core_type<tc>} {
    %c0 = arith.constant 0 : index
    %c0_0 = arith.constant 0 : index
    %0 = vector.load %arg0[%c0, %c0_0] : memref<8x128xf32, #tpu.memory_space<vmem>>, vector<8x128xf32>
    %c1_i32 = arith.constant 1 : i32
    %1 = tpu.dynamic_rotate %0 by %c1_i32 dim 1 : vector<8x128xf32>, i32 -> vector<8x128xf32>
    %c0_1 = arith.constant 0 : index
    %c0_2 = arith.constant 0 : index
    %2 = vector.load %arg1[%c0_1, %c0_2] : memref<8x128xf32, #tpu.memory_space<vmem>>, vector<8x128xf32>
    tpu.vector_store %arg1[%c0_1, %c0_2], %1 {strides = array<i32>} : memref<8x128xf32, #tpu.memory_space<vmem>>, vector<8x128xf32>,
    return
  }
}

</mosaic_0001>

<llo_original>
// kernel: tpu_custom_call.1
$region0: #{tpu_custom_call.1}
  #allocation0 [shape = 'u32[]', space=smem, size = 0x4, offset = 0x4, fixed_abs, tag = 'smem constant byte address 0x4 - core index']
  #allocation1 [shape = 'u32[72,128]{1,0:T(1,128)}', space=vmem, size = 0x9000, scoped, tag = 'internal scratch']
  %s0 = inlined_call_operand.hbm [shape: f32[8,128], index: 0, kind: input, shape index: {}]
  %s1 = inlined_call_operand.hbm [shape: f32[8,128], index: 1, kind: output, shape index: {}]
  %s2 = sld [smem:[#allocation0]]
  $region18: #{tpu_custom_call.1} parent=0
    _
  %s4 = ssub.s32 1, %s2
  %s5 = scalar_select 0, %s4, %s2
  $region1: #{tpu_custom_call.1} parent=0
    #allocation2 [shape = 'u8[4096]{0}', space=vmem, size = 0x1000, scoped, tag = 'input window, operand 0, single buffered']
    #allocation3 [shape = 's32[1]{0}', space=sflag, size = 0x4, scoped, tag = 'scoped memory for tpu_custom_call.1']
    #allocation4 [shape = 's32[1]{0}', space=sflag, size = 0x4, scoped, tag = 'scoped memory for tpu_custom_call.1']
    #allocation5 [shape = 'u8[4096]{0}', space=vmem, size = 0x1000, scoped, tag = 'output window, operand 0, single buffered']
    %6 = vsyncpa [#allocation3], 0
    %7 = vsyncpa [#allocation4], 0
    // Predicated region
    $region2: #{tpu_custom_call.1} parent=1 // pred_check
      _
    $region3: #{tpu_custom_call.1} parent=1 // pred_check_branch
      %9 = sbr.rel (0) target = $region5
    $region4: #{tpu_custom_call.1} parent=1 // pred_region
      %11 = vsyncadd [#allocation3], 0
      %s13 = sshll.u32 %s0, 4
      %s14 = int_to_ptr.hbm [resolvable:$true] %s13
      %s15 = sshll.u32 [#allocation2], 4
      %s16 = int_to_ptr.vmem [resolvable:$true] %s15
      %18 = dma.hbm_to_vmem [thread:$0]  %s14, 128, %s16, [#allocation3]
    $region5: #{tpu_custom_call.1} parent=1 // pred_fallthru
      _
    // Predicated region
    $region6: #{tpu_custom_call.1} parent=1 // pred_check
      _
    $region7: #{tpu_custom_call.1} parent=1 // pred_check_branch
      %20 = sbr.rel (0) target = $region9
    $region8: #{tpu_custom_call.1} parent=1 // pred_region
      %22 = dma.done [#allocation3], 128
    $region9: #{tpu_custom_call.1} parent=1 // pred_fallthru
      _
    %v23 = vld [vmem:[#allocation2] sm:$0xff]
    %24 = vrot.lane.b32.xlu0 %v23, 1
    %v25 = vpop.permute.xlu0 %24
    %26 = vst [vmem:[#allocation5] sm:$0xff] %v25
    // Predicated region
    $region10: #{tpu_custom_call.1} parent=1 // pred_check
      _
    $region11: #{tpu_custom_call.1} parent=1 // pred_check_branch
      %28 = sbr.rel (0) target = $region13
    $region12: #{tpu_custom_call.1} parent=1 // pred_region
      %30 = vsyncadd [#allocation4], 0
      %s32 = sshll.u32 [#allocation5], 4
      %s33 = int_to_ptr.vmem [resolvable:$true] %s32
      %s34 = sshll.u32 %s1, 4
      %s35 = int_to_ptr.hbm [resolvable:$true] %s34
      %37 = dma.vmem_to_hbm [thread:$0]  %s33, 128, %s35, [#allocation4]
    $region13: #{tpu_custom_call.1} parent=1 // pred_fallthru
      _
    // Predicated region
    $region14: #{tpu_custom_call.1} parent=1 // pred_check
      _
    $region15: #{tpu_custom_call.1} parent=1 // pred_check_branch
      %39 = sbr.rel (0) target = $region17
    $region16: #{tpu_custom_call.1} parent=1 // pred_region
      %41 = dma.done [#allocation4], 128
    $region17: #{tpu_custom_call.1} parent=1 // pred_fallthru
      _
    %42 = vsyncpa [#allocation3], 1
    %43 = vsyncpa [#allocation4], 1

</llo_original>
